<compile_context>
chip_gen: v5e
topology: v5e:2x2
jax: 0.10.0
libtpu: 0.0.40
codegen_flags: <defaults>
</compile_context>

<pallas_src>
import jax
import jax.numpy as jnp
from jax.experimental import pallas as pl
from jax.experimental.pallas import tpu as pltpu

_NEG_SLOPE = 0.2
_BN_EPS = 1e-5


def _leaky_relu(x):
    # max(x, 0.2*x) == LeakyReLU(0.2) for slope < 1
    return jnp.maximum(x, _NEG_SLOPE * x)


def _pick_batch_tile(B, L2, target_rows=1024):
    """Largest bt dividing B with bt*L2 rows per tile, sublane-aligned, ~target."""
    cap = max(1, min(B, max(1, target_rows // max(L2, 1))))
    for bt in range(cap, 0, -1):
        if B % bt == 0 and (bt * L2) % 8 == 0:
            return bt
    return B  # fall back to a single whole-batch step (block == full array is legal)


def discriminator_forward(params, x, batch_tile=None):
    """x: [B, vocab_size, seq_len] (PyTorch NCL). Returns [B, 1] f32."""
    B, V, L = x.shape
    assert L % 4 == 0, "seq_len must be divisible by 4 (implied by fc in-features)"
    L2 = L // 4
    n = B * L2

    bt = _pick_batch_tile(B, L2) if batch_tile is None else int(batch_tile)
    assert B % bt == 0 and ((bt * L2) % 8 == 0 or bt == B), (B, L2, bt)
    tm = bt * L2          # rows per grid step (batch-aligned so conv2's roll+mask is exact)
    nsteps = B // bt

    # ---- trace-time prep: static slices / static weight permutations only ----
    xt = jnp.transpose(x, (0, 2, 1))               # [B, L, V] channels-last
    xp = jnp.pad(xt, ((0, 0), (1, 1), (0, 0)))     # conv1 pad=1 -> [B, L+2, V]

    # conv1 im2col patches grouped by conv1 output-position parity; tap order kk*V+v.
    def patch_group(start):                        # taps at padded positions start+4*t2+kk
        taps = [xp[:, start + kk: start + kk + 4 * (L2 - 1) + 1: 4, :]
                for kk in range(3)]
        return jnp.concatenate(taps, axis=-1).reshape(n, 3 * V)

    p1e = patch_group(0).astype(jnp.bfloat16)      # conv1 positions 2*t2
    p1o = patch_group(2).astype(jnp.bfloat16)      # conv1 positions 2*t2 + 1

    # static weight permutations (free at trace time); MXU operands in bf16
    w1_r = params["w1"].transpose(2, 1, 0).reshape(3 * V, 64).astype(jnp.bfloat16)
    b1_r = params["b1"].reshape(1, 64).astype(jnp.float32)
    w2_r = params["w2"].transpose(2, 1, 0).reshape(192, 128).astype(jnp.bfloat16)
    b2_r = params["b2"].reshape(1, 128).astype(jnp.float32)
    g_r = params["gamma"].reshape(1, 128).astype(jnp.float32)
    be_r = params["beta"].reshape(1, 128).astype(jnp.float32)
    # FC weight in h2's (t2-row, channel-lane) layout; absorbs the .view(B,-1)
    # flatten of [B,128,L2] (flat idx c*L2+t2).  NOT tiled by B.
    wfc_r = params["wfc"].reshape(128, L2).T.astype(jnp.float32)        # [L2, 128]

    def kernel(p1e_ref, p1o_ref, w1_ref, b1_ref, w2_ref, b2_ref,
               g_ref, beta_ref, wfc_ref, o_ref, z2_buf, s_acc):
        i = pl.program_id(0)

        @pl.when(i == 0)
        def _():
            s_acc[...] = jnp.zeros_like(s_acc)

        # ---- conv1 (bf16 MXU, f32 accum) + bias + LeakyReLU -----------------
        h1e = _leaky_relu(
            jnp.dot(p1e_ref[...], w1_ref[...], preferred_element_type=jnp.float32)
            + b1_ref[...])                                           # [tm, 64] f32
        h1o = _leaky_relu(
            jnp.dot(p1o_ref[...], w1_ref[...], preferred_element_type=jnp.float32)
            + b1_ref[...])                                           # [tm, 64] f32

        # ---- conv2 stride-2 taps, all VMEM-resident (no third im2col group) --
        # tap kk=0 is h1 position 2*t2-1 == previous odd row; rows with t2==0
        # read conv2's left zero-pad -> masked.  Row tiles are batch-aligned so
        # the sublane roll never reaches an unmasked row across batch elements.
        t2_in_tile = jax.lax.broadcasted_iota(jnp.int32, (tm, 1), 0) % L2
        prev_odd = jnp.where(t2_in_tile == 0, 0.0,
                             pltpu.roll(h1o, shift=1, axis=0))
        tap_p = prev_odd.astype(jnp.bfloat16)                        # kk=0
        tap_e = h1e.astype(jnp.bfloat16)                             # kk=1
        tap_o = h1o.astype(jnp.bfloat16)                             # kk=2

        # three K=64 dots; a single K=192 dot would need a lane concat that
        # straddles the 128-lane vreg (relayout copy), so keep them split.
        z2 = (jnp.dot(tap_p, w2_ref[0:64, :], preferred_element_type=jnp.float32)
              + jnp.dot(tap_e, w2_ref[64:128, :], preferred_element_type=jnp.float32)
              + jnp.dot(tap_o, w2_ref[128:192, :], preferred_element_type=jnp.float32)
              + b2_ref[...])                                         # [tm, 128] f32

        # ---- stash z2 (BN+FC need every row) and accumulate BN channel sums --
        row0 = pl.multiple_of(i * tm, 8) if tm % 8 == 0 else i * tm
        z2_buf[pl.ds(row0, tm), :] = z2
        s_acc[...] += jnp.sum(z2, axis=0, keepdims=True)

        # ---- last step: BatchNorm (centered variance), LReLU, FC reduction ---
        @pl.when(i == nsteps - 1)
        def _():
            inv_n = 1.0 / n
            mean = s_acc[...] * inv_n                                # [1, 128]
            z2_all = z2_buf[...]                                     # [n, 128] f32
            d = z2_all - mean
            var = jnp.sum(d * d, axis=0, keepdims=True) * inv_n      # centered, biased
            scale = g_ref[...] * jax.lax.rsqrt(var + _BN_EPS)
            shift = beta_ref[...] - mean * scale
            h2 = _leaky_relu(z2_all * scale + shift)                 # [n, 128]
            # FC: broadcast wfc over batch; per-batch segment sum = reshape +
            # sublane reduce (no one-hot matmul, no B-tiled weight).
            prod = h2.reshape(B, L2, 128) * wfc_ref[...][None, :, :]
            o_ref[...] = jnp.sum(prod, axis=1)                       # [B, 128] lane-dense

    row_spec = pl.BlockSpec((tm, 3 * V), lambda i: (i, 0))

    def full_spec(shape):
        return pl.BlockSpec(shape, lambda i: (0,) * len(shape))

    # explicit scoped-VMEM budget: double-buffered patch tiles + resident
    # weights/stash, with headroom (v5e default is only 16 MiB, v7x has 64 MiB)
    est = (2 * 2 * tm * 3 * V * 2                       # 2x double-buffered p1e/p1o (bf16)
           + (3 * V * 64 + 192 * 128) * 2               # conv weights (bf16)
           + (64 + 3 * 128 + L2 * 128 + B * 128 + n * 128 + 128) * 4)
    vmem_limit = int(min(64 * 2 ** 20, max(8 * 2 ** 20, 2 * est)))

    part = pl.pallas_call(
        kernel,
        out_shape=jax.ShapeDtypeStruct((B, 128), jnp.float32),
        grid=(nsteps,),
        in_specs=[row_spec, row_spec,
                  full_spec((3 * V, 64)), full_spec((1, 64)),
                  full_spec((192, 128)), full_spec((1, 128)),
                  full_spec((1, 128)), full_spec((1, 128)),
                  full_spec((L2, 128))],
        out_specs=full_spec((B, 128)),
        scratch_shapes=[pltpu.VMEM((n, 128), jnp.float32),   # z2 stash
                        pltpu.VMEM((1, 128), jnp.float32)],  # BN channel sums
        compiler_params=pltpu.CompilerParams(
            dimension_semantics=("arbitrary",),   # carries BN sums / z2 stash / output
            vmem_limit_bytes=vmem_limit),
    )(p1e, p1o, w1_r, b1_r, w2_r, b2_r, g_r, be_r, wfc_r)

    # lane-dense partial -> scalar per batch element (keeps the kernel's store
    # unmasked/lane-dense); bias added here so it never enters the kernel.
    return jnp.sum(part, axis=-1, keepdims=True) + params["bfc"].reshape(1, 1)


# ------------------------------ params & reference -------------------------

def init_params(key, seq_len, vocab_size):
    ks = jax.random.split(key, 8)
    return dict(
        w1=jax.random.normal(ks[0], (64, vocab_size, 3), jnp.float32) * 0.1,   # Conv1d [out,in,k]
        b1=jax.random.normal(ks[1], (64,), jnp.float32) * 0.05,
        w2=jax.random.normal(ks[2], (128, 64, 3), jnp.float32) * 0.1,
        b2=jax.random.normal(ks[3], (128,), jnp.float32) * 0.05,
        gamma=1.0 + 0.1 * jax.random.normal(ks[4], (128,), jnp.float32),
        beta=0.1 * jax.random.normal(ks[5], (128,), jnp.float32),
        wfc=jax.random.normal(ks[6], (1, 128 * seq_len // 4), jnp.float32) * 0.05,  # Linear [out,in]
        bfc=jax.random.normal(ks[7], (1,), jnp.float32) * 0.05,
    )


def reference_forward(params, x):
    """Pure-JAX reference (lax.conv) with identical math, for correctness check."""
    B = x.shape[0]
    dn = ("NCH", "OIH", "NCH")
    z1 = jax.lax.conv_general_dilated(x, params["w1"], (2,), ((1, 1),),
                                      dimension_numbers=dn)
    z1 = z1 + params["b1"][None, :, None]
    h1 = jnp.maximum(z1, _NEG_SLOPE * z1)
    z2 = jax.lax.conv_general_dilated(h1, params["w2"], (2,), ((1, 1),),
                                      dimension_numbers=dn)
    z2 = z2 + params["b2"][None, :, None]
    mean = jnp.mean(z2, axis=(0, 2), keepdims=True)
    var = jnp.mean((z2 - mean) ** 2, axis=(0, 2), keepdims=True)
    z2n = ((z2 - mean) / jnp.sqrt(var + _BN_EPS)
           * params["gamma"][None, :, None] + params["beta"][None, :, None])
    h2 = jnp.maximum(z2n, _NEG_SLOPE * z2n)
    flat = h2.reshape(B, -1)
    return flat @ params["wfc"].T + params["bfc"][None, :]


if __name__ == "__main__":
    seq_len, vocab_size, batch = 32, 8, 4      # L2 = 8, n = 32
    key = jax.random.PRNGKey(0)
    kx, kp = jax.random.split(key)
    x = jax.random.normal(kx, (batch, vocab_size, seq_len), jnp.float32)
    params = init_params(kp, seq_len, vocab_size)

    ref = reference_forward(params, x)

    # gridded path: one batch element per row tile -> 4 pipelined grid steps
    fwd_tiled = jax.jit(lambda p, xx: discriminator_forward(p, xx, batch_tile=1))
    out_tiled = jax.block_until_ready(fwd_tiled(params, x))
    # auto tile: whole batch fits one step at these toy sizes
    fwd_auto = jax.jit(discriminator_forward)
    out_auto = jax.block_until_ready(fwd_auto(params, x))

    for out in (out_tiled, out_auto):
        assert out.shape == (batch, 1), out.shape
        assert bool(jnp.all(jnp.isfinite(out)))
        assert jnp.allclose(out, ref, atol=5e-2, rtol=5e-2), (out, ref)
    print("KERNEL_OK")
</pallas_src>

<mosaic_0001>
module attributes {stable_mosaic.version = 11 : i64} {
  func.func @kernel(%arg0: i32, %arg1: memref<8x24xbf16, #tpu.memory_space<vmem>>, %arg2: memref<8x24xbf16, #tpu.memory_space<vmem>>, %arg3: memref<24x64xbf16, #tpu.memory_space<vmem>>, %arg4: memref<1x64xf32, #tpu.memory_space<vmem>>, %arg5: memref<192x128xbf16, #tpu.memory_space<vmem>>, %arg6: memref<1x128xf32, #tpu.memory_space<vmem>>, %arg7: memref<1x128xf32, #tpu.memory_space<vmem>>, %arg8: memref<1x128xf32, #tpu.memory_space<vmem>>, %arg9: memref<8x128xf32, #tpu.memory_space<vmem>>, %arg10: memref<4x128xf32, #tpu.memory_space<vmem>>, %arg11: memref<32x128xf32, #tpu.memory_space<vmem>>, %arg12: memref<1x128xf32, #tpu.memory_space<vmem>>) attributes {dimension_semantics = [#tpu.dimension_semantics<arbitrary>], iteration_bounds = array<i64: 4>, scalar_prefetch = 0 : i64, scratch_operands = 2 : i64, tpu.core_type = #tpu.core_type<tc>, window_params = [{transform_indices = @transform_0, window_bounds = array<i64: 8, 24>}, {transform_indices = @transform_1, window_bounds = array<i64: 8, 24>}, {pipeline_mode = #tpu.pipeline_mode<synchronous>, transform_indices = @transform_2, window_bounds = array<i64: 24, 64>}, {pipeline_mode = #tpu.pipeline_mode<synchronous>, transform_indices = @transform_3, window_bounds = array<i64: 1, 64>}, {pipeline_mode = #tpu.pipeline_mode<synchronous>, transform_indices = @transform_4, window_bounds = array<i64: 192, 128>}, {pipeline_mode = #tpu.pipeline_mode<synchronous>, transform_indices = @transform_5, window_bounds = array<i64: 1, 128>}, {pipeline_mode = #tpu.pipeline_mode<synchronous>, transform_indices = @transform_6, window_bounds = array<i64: 1, 128>}, {pipeline_mode = #tpu.pipeline_mode<synchronous>, transform_indices = @transform_7, window_bounds = array<i64: 1, 128>}, {pipeline_mode = #tpu.pipeline_mode<synchronous>, transform_indices = @transform_8, window_bounds = array<i64: 8, 128>}, {pipeline_mode = #tpu.pipeline_mode<synchronous>, transform_indices = @transform_9, window_bounds = array<i64: 4, 128>}]} {
    %c0_i32 = arith.constant 0 : i32
    %0 = arith.cmpi eq, %arg0, %c0_i32 : i32
    %1 = arith.extui %0 : i1 to i32
    %c0_i32_0 = arith.constant 0 : i32
    %2 = arith.cmpi ne, %1, %c0_i32_0 : i32
    scf.if %2 {
      %cst_39 = arith.constant 0.000000e+00 : f32
      %71 = vector.broadcast %cst_39 : f32 to vector<1x128xf32>
      %c0_40 = arith.constant 0 : index
      %c0_41 = arith.constant 0 : index
      %72 = vector.load %arg12[%c0_40, %c0_41] : memref<1x128xf32, #tpu.memory_space<vmem>>, vector<1x128xf32>
      tpu.vector_store %arg12[%c0_40, %c0_41], %71 {strides = array<i32>} : memref<1x128xf32, #tpu.memory_space<vmem>>, vector<1x128xf32>,
    } else {
    }
    %c0 = arith.constant 0 : index
    %c0_1 = arith.constant 0 : index
    %3 = vector.load %arg1[%c0, %c0_1] : memref<8x24xbf16, #tpu.memory_space<vmem>>, vector<8x24xbf16>
    %c0_2 = arith.constant 0 : index
    %c0_3 = arith.constant 0 : index
    %4 = vector.load %arg3[%c0_2, %c0_3] : memref<24x64xbf16, #tpu.memory_space<vmem>>, vector<24x64xbf16>
    %cst = arith.constant dense<0.000000e+00> : vector<8x64xf32>
    %5 = tpu.matmul %3, %4, %cst {dimension_numbers = #tpu.dot_dimension_numbers<[1], [0], [0], [1], [0, 0, 1, 1], [], []>} : vector<8x24xbf16>, vector<24x64xbf16>, vector<8x64xf32> -> vector<8x64xf32>
    %c0_4 = arith.constant 0 : index
    %c0_5 = arith.constant 0 : index
    %6 = vector.load %arg4[%c0_4, %c0_5] : memref<1x64xf32, #tpu.memory_space<vmem>>, vector<1x64xf32>
    %7 = vector.broadcast %6 : vector<1x64xf32> to vector<8x64xf32>
    %8 = arith.addf %5, %7 : vector<8x64xf32>
    %cst_6 = arith.constant 2.000000e-01 : f32
    %9 = vector.broadcast %cst_6 : f32 to vector<8x64xf32>
    %10 = arith.mulf %9, %8 : vector<8x64xf32>
    %11 = arith.maximumf %8, %10 : vector<8x64xf32>
    %c0_7 = arith.constant 0 : index
    %c0_8 = arith.constant 0 : index
    %12 = vector.load %arg2[%c0_7, %c0_8] : memref<8x24xbf16, #tpu.memory_space<vmem>>, vector<8x24xbf16>
    %c0_9 = arith.constant 0 : index
    %c0_10 = arith.constant 0 : index
    %13 = vector.load %arg3[%c0_9, %c0_10] : memref<24x64xbf16, #tpu.memory_space<vmem>>, vector<24x64xbf16>
    %cst_11 = arith.constant dense<0.000000e+00> : vector<8x64xf32>
    %14 = tpu.matmul %12, %13, %cst_11 {dimension_numbers = #tpu.dot_dimension_numbers<[1], [0], [0], [1], [0, 0, 1, 1], [], []>} : vector<8x24xbf16>, vector<24x64xbf16>, vector<8x64xf32> -> vector<8x64xf32>
    %c0_12 = arith.constant 0 : index
    %c0_13 = arith.constant 0 : index
    %15 = vector.load %arg4[%c0_12, %c0_13] : memref<1x64xf32, #tpu.memory_space<vmem>>, vector<1x64xf32>
    %16 = vector.broadcast %15 : vector<1x64xf32> to vector<8x64xf32>
    %17 = arith.addf %14, %16 : vector<8x64xf32>
    %cst_14 = arith.constant 2.000000e-01 : f32
    %18 = vector.broadcast %cst_14 : f32 to vector<8x64xf32>
    %19 = arith.mulf %18, %17 : vector<8x64xf32>
    %20 = arith.maximumf %17, %19 : vector<8x64xf32>
    %21 = tpu.iota {dimensions = array<i32: 0>} : vector<8x1xi32>
    %c8_i32 = arith.constant 8 : i32
    %c0_i32_15 = arith.constant 0 : i32
    %22 = arith.cmpi eq, %c8_i32, %c0_i32_15 : i32
    %c1_i32 = arith.constant 1 : i32
    %23 = arith.select %22, %c1_i32, %c8_i32 : i32
    %24 = vector.broadcast %23 : i32 to vector<8x1xi32>
    %25 = arith.remsi %21, %24 : vector<8x1xi32>
    %c0_i32_16 = arith.constant 0 : i32
    %26 = vector.broadcast %c0_i32_16 : i32 to vector<8x1xi32>
    %27 = arith.cmpi ne, %25, %26 : vector<8x1xi32>
    %c0_i32_17 = arith.constant 0 : i32
    %28 = vector.broadcast %c0_i32_17 : i32 to vector<8x1xi32>
    %29 = arith.cmpi slt, %25, %28 : vector<8x1xi32>
    %c0_i32_18 = arith.constant 0 : i32
    %30 = arith.cmpi slt, %23, %c0_i32_18 : i32
    %31 = vector.broadcast %30 : i1 to vector<8x1xi1>
    %32 = vector.broadcast %31 : vector<8x1xi1> to vector<8x1xi1>
    %33 = arith.xori %29, %32 : vector<8x1xi1>
    %34 = arith.andi %33, %27 : vector<8x1xi1>
    %35 = vector.broadcast %23 : i32 to vector<8x1xi32>
    %36 = arith.addi %25, %35 : vector<8x1xi32>
    %37 = arith.select %34, %36, %25 : vector<8x1xi1>, vector<8x1xi32>
    %c0_i32_19 = arith.constant 0 : i32
    %38 = vector.broadcast %c0_i32_19 : i32 to vector<8x1xi32>
    %39 = arith.cmpi eq, %37, %38 : vector<8x1xi32>
    %c1_i32_20 = arith.constant 1 : i32
    %40 = tpu.dynamic_rotate %20 by %c1_i32_20 dim 0 : vector<8x64xf32>, i32 -> vector<8x64xf32>
    %cst_21 = arith.constant 0.000000e+00 : f32
    %41 = vector.shape_cast %39 : vector<8x1xi1> to vector<8x1xi1>
    %42 = vector.broadcast %41 : vector<8x1xi1> to vector<8x64xi1>
    %43 = vector.broadcast %cst_21 : f32 to vector<8x64xf32>
    %44 = arith.select %42, %43, %40 : vector<8x64xi1>, vector<8x64xf32>
    %45 = arith.truncf %44 : vector<8x64xf32> to vector<8x64xbf16>
    %46 = arith.truncf %11 : vector<8x64xf32> to vector<8x64xbf16>
    %47 = arith.truncf %20 : vector<8x64xf32> to vector<8x64xbf16>
    %c0_22 = arith.constant 0 : index
    %c0_23 = arith.constant 0 : index
    %48 = vector.load %arg5[%c0_22, %c0_23] : memref<192x128xbf16, #tpu.memory_space<vmem>>, vector<64x128xbf16>
    %cst_24 = arith.constant dense<0.000000e+00> : vector<8x128xf32>
    %49 = tpu.matmul %45, %48, %cst_24 {dimension_numbers = #tpu.dot_dimension_numbers<[1], [0], [0], [1], [0, 0, 1, 1], [], []>} : vector<8x64xbf16>, vector<64x128xbf16>, vector<8x128xf32> -> vector<8x128xf32>
    %c64 = arith.constant 64 : index
    %c0_25 = arith.constant 0 : index
    %50 = vector.load %arg5[%c64, %c0_25] : memref<192x128xbf16, #tpu.memory_space<vmem>>, vector<64x128xbf16>
    %cst_26 = arith.constant dense<0.000000e+00> : vector<8x128xf32>
    %51 = tpu.matmul %46, %50, %cst_26 {dimension_numbers = #tpu.dot_dimension_numbers<[1], [0], [0], [1], [0, 0, 1, 1], [], []>} : vector<8x64xbf16>, vector<64x128xbf16>, vector<8x128xf32> -> vector<8x128xf32>
    %52 = arith.addf %49, %51 : vector<8x128xf32>
    %c128 = arith.constant 128 : index
    %c0_27 = arith.constant 0 : index
    %53 = vector.load %arg5[%c128, %c0_27] : memref<192x128xbf16, #tpu.memory_space<vmem>>, vector<64x128xbf16>
    %cst_28 = arith.constant dense<0.000000e+00> : vector<8x128xf32>
    %54 = tpu.matmul %47, %53, %cst_28 {dimension_numbers = #tpu.dot_dimension_numbers<[1], [0], [0], [1], [0, 0, 1, 1], [], []>} : vector<8x64xbf16>, vector<64x128xbf16>, vector<8x128xf32> -> vector<8x128xf32>
    %55 = arith.addf %52, %54 : vector<8x128xf32>
    %c0_29 = arith.constant 0 : index
    %c0_30 = arith.constant 0 : index
    %56 = vector.load %arg6[%c0_29, %c0_30] : memref<1x128xf32, #tpu.memory_space<vmem>>, vector<1x128xf32>
    %57 = vector.broadcast %56 : vector<1x128xf32> to vector<8x128xf32>
    %58 = arith.addf %55, %57 : vector<8x128xf32>
    %c8_i32_31 = arith.constant 8 : i32
    %59 = arith.muli %arg0, %c8_i32_31 : i32
    %60 = tpu.assume_multiple %59, 8 : i32
    %61 = arith.index_cast %60 : i32 to index
    %c0_32 = arith.constant 0 : index
    %62 = vector.load %arg11[%61, %c0_32] : memref<32x128xf32, #tpu.memory_space<vmem>>, vector<8x128xf32>
    tpu.vector_store %arg11[%61, %c0_32], %58 {strides = array<i32>} : memref<32x128xf32, #tpu.memory_space<vmem>>, vector<8x128xf32>,
    %c0_33 = arith.constant 0 : index
    %c0_34 = arith.constant 0 : index
    %63 = vector.load %arg12[%c0_33, %c0_34] : memref<1x128xf32, #tpu.memory_space<vmem>>, vector<1x128xf32>
    %cst_35 = arith.constant dense<0.000000e+00> : vector<128xf32>
    %64 = vector.multi_reduction <add>, %58, %cst_35 [0] : vector<8x128xf32> to vector<128xf32>
    %65 = vector.shape_cast %64 : vector<128xf32> to vector<1x128xf32>
    %66 = arith.addf %63, %65 : vector<1x128xf32>
    %c0_36 = arith.constant 0 : index
    %c0_37 = arith.constant 0 : index
    %67 = vector.load %arg12[%c0_36, %c0_37] : memref<1x128xf32, #tpu.memory_space<vmem>>, vector<1x128xf32>
    tpu.vector_store %arg12[%c0_36, %c0_37], %66 {strides = array<i32>} : memref<1x128xf32, #tpu.memory_space<vmem>>, vector<1x128xf32>,
    %c3_i32 = arith.constant 3 : i32
    %68 = arith.cmpi eq, %arg0, %c3_i32 : i32
    %69 = arith.extui %68 : i1 to i32
    %c0_i32_38 = arith.constant 0 : i32
    %70 = arith.cmpi ne, %69, %c0_i32_38 : i32
    scf.if %70 {
      %c0_39 = arith.constant 0 : index
      %c0_40 = arith.constant 0 : index
      %71 = vector.load %arg12[%c0_39, %c0_40] : memref<1x128xf32, #tpu.memory_space<vmem>>, vector<1x128xf32>
      %cst_41 = arith.constant 3.125000e-02 : f32
      %72 = vector.broadcast %cst_41 : f32 to vector<1x128xf32>
      %73 = arith.mulf %71, %72 : vector<1x128xf32>
      %c0_42 = arith.constant 0 : index
      %c0_43 = arith.constant 0 : index
      %74 = vector.load %arg11[%c0_42, %c0_43] : memref<32x128xf32, #tpu.memory_space<vmem>>, vector<32x128xf32>
      %75 = vector.broadcast %73 : vector<1x128xf32> to vector<32x128xf32>
      %76 = arith.subf %74, %75 : vector<32x128xf32>
      %77 = arith.mulf %76, %76 : vector<32x128xf32>
      %cst_44 = arith.constant dense<0.000000e+00> : vector<128xf32>
      %78 = vector.multi_reduction <add>, %77, %cst_44 [0] : vector<32x128xf32> to vector<128xf32>
      %79 = vector.shape_cast %78 : vector<128xf32> to vector<1x128xf32>
      %cst_45 = arith.constant 3.125000e-02 : f32
      %80 = vector.broadcast %cst_45 : f32 to vector<1x128xf32>
      %81 = arith.mulf %79, %80 : vector<1x128xf32>
      %c0_46 = arith.constant 0 : index
      %c0_47 = arith.constant 0 : index
      %82 = vector.load %arg7[%c0_46, %c0_47] : memref<1x128xf32, #tpu.memory_space<vmem>>, vector<1x128xf32>
      %cst_48 = arith.constant 9.99999974E-6 : f32
      %83 = vector.broadcast %cst_48 : f32 to vector<1x128xf32>
      %84 = arith.addf %81, %83 : vector<1x128xf32>
      %85 = math.rsqrt %84 : vector<1x128xf32>
      %86 = arith.mulf %82, %85 : vector<1x128xf32>
      %c0_49 = arith.constant 0 : index
      %c0_50 = arith.constant 0 : index
      %87 = vector.load %arg8[%c0_49, %c0_50] : memref<1x128xf32, #tpu.memory_space<vmem>>, vector<1x128xf32>
      %88 = arith.mulf %73, %86 : vector<1x128xf32>
      %89 = arith.subf %87, %88 : vector<1x128xf32>
      %90 = vector.broadcast %86 : vector<1x128xf32> to vector<32x128xf32>
      %91 = arith.mulf %74, %90 : vector<32x128xf32>
      %92 = vector.broadcast %89 : vector<1x128xf32> to vector<32x128xf32>
      %93 = arith.addf %91, %92 : vector<32x128xf32>
      %cst_51 = arith.constant 2.000000e-01 : f32
      %94 = vector.broadcast %cst_51 : f32 to vector<32x128xf32>
      %95 = arith.mulf %94, %93 : vector<32x128xf32>
      %96 = arith.maximumf %93, %95 : vector<32x128xf32>
      %97 = vector.shape_cast %96 : vector<32x128xf32> to vector<4x8x128xf32>
      %c0_52 = arith.constant 0 : index
      %c0_53 = arith.constant 0 : index
      %98 = vector.load %arg9[%c0_52, %c0_53] : memref<8x128xf32, #tpu.memory_space<vmem>>, vector<8x128xf32>
      %99 = vector.shape_cast %98 : vector<8x128xf32> to vector<1x8x128xf32>
      %100 = vector.broadcast %99 : vector<1x8x128xf32> to vector<4x8x128xf32>
      %101 = arith.mulf %97, %100 : vector<4x8x128xf32>
      %cst_54 = arith.constant dense<0.000000e+00> : vector<4x128xf32>
      %102 = vector.multi_reduction <add>, %101, %cst_54 [1] : vector<4x8x128xf32> to vector<4x128xf32>
      %c0_55 = arith.constant 0 : index
      %c0_56 = arith.constant 0 : index
      %103 = vector.load %arg10[%c0_55, %c0_56] : memref<4x128xf32, #tpu.memory_space<vmem>>, vector<4x128xf32>
      tpu.vector_store %arg10[%c0_55, %c0_56], %102 {strides = array<i32>} : memref<4x128xf32, #tpu.memory_space<vmem>>, vector<4x128xf32>,
    } else {
    }
    return
  }
  func.func @transform_0(%arg0: i32) -> (i32, i32) {
    %c0_i32 = arith.constant 0 : i32
    %c0_i32_0 = arith.constant 0 : i32
    return %arg0, %c0_i32 : i32, i32
  }
  func.func @transform_1(%arg0: i32) -> (i32, i32) {
    %c0_i32 = arith.constant 0 : i32
    %c0_i32_0 = arith.constant 0 : i32
    return %arg0, %c0_i32 : i32, i32
  }
  func.func @transform_2(%arg0: i32) -> (i32, i32) {
    %c0_i32 = arith.constant 0 : i32
    %c0_i32_0 = arith.constant 0 : i32
    %c0_i32_1 = arith.constant 0 : i32
    return %c0_i32, %c0_i32_0 : i32, i32
  }
  func.func @transform_3(%arg0: i32) -> (i32, i32) {
    %c0_i32 = arith.constant 0 : i32
    %c0_i32_0 = arith.constant 0 : i32
    %c0_i32_1 = arith.constant 0 : i32
    return %c0_i32, %c0_i32_0 : i32, i32
  }
  func.func @transform_4(%arg0: i32) -> (i32, i32) {
    %c0_i32 = arith.constant 0 : i32
    %c0_i32_0 = arith.constant 0 : i32
    %c0_i32_1 = arith.constant 0 : i32
    return %c0_i32, %c0_i32_0 : i32, i32
  }
  func.func @transform_5(%arg0: i32) -> (i32, i32) {
    %c0_i32 = arith.constant 0 : i32
    %c0_i32_0 = arith.constant 0 : i32
    %c0_i32_1 = arith.constant 0 : i32
    return %c0_i32, %c0_i32_0 : i32, i32
  }
  func.func @transform_6(%arg0: i32) -> (i32, i32) {
    %c0_i32 = arith.constant 0 : i32
    %c0_i32_0 = arith.constant 0 : i32
    %c0_i32_1 = arith.constant 0 : i32
    return %c0_i32, %c0_i32_0 : i32, i32
  }
  func.func @transform_7(%arg0: i32) -> (i32, i32) {
    %c0_i32 = arith.constant 0 : i32
    %c0_i32_0 = arith.constant 0 : i32
    %c0_i32_1 = arith.constant 0 : i32
    return %c0_i32, %c0_i32_0 : i32, i32
  }
  func.func @transform_8(%arg0: i32) -> (i32, i32) {
    %c0_i32 = arith.constant 0 : i32
    %c0_i32_0 = arith.constant 0 : i32
    %c0_i32_1 = arith.constant 0 : i32
    return %c0_i32, %c0_i32_0 : i32, i32
  }
  func.func @transform_9(%arg0: i32) -> (i32, i32) {
    %c0_i32 = arith.constant 0 : i32
    %c0_i32_0 = arith.constant 0 : i32
    %c0_i32_1 = arith.constant 0 : i32
    return %c0_i32, %c0_i32_0 : i32, i32
  }
}

</mosaic_0001>

<llo_original>
// kernel: _lambda_.1
$region0: #{_lambda_.1}
  #allocation0 [shape = 'u32[]', space=smem, size = 0x4, offset = 0x4, fixed_abs, tag = 'smem constant byte address 0x4 - core index']
  #allocation1 [shape = 'u32[72,128]{1,0:T(1,128)}', space=vmem, size = 0x9000, scoped, tag = 'internal scratch']
  #allocation2 [shape = 'f32[32,128]{1,0:T(8,128)}', space=vmem, size = 0x4000, scoped, tag = 'scratch operand']
  #allocation3 [shape = 'f32[1,128]{1,0:T(1,128)}', space=vmem, size = 0x200, scoped, tag = 'scratch operand']
  %s0 = inlined_call_operand.vmem [shape: bf16[32,24], index: 0, kind: input, shape index: {}]
  %s1 = inlined_call_operand.vmem [shape: bf16[32,24], index: 1, kind: input, shape index: {}]
  %s2 = inlined_call_operand.vmem [shape: bf16[24,64], index: 2, kind: input, shape index: {}]
  %s3 = inlined_call_operand.vmem [shape: f32[1,64], index: 3, kind: input, shape index: {}]
  %s4 = inlined_call_operand.vmem [shape: bf16[192,128], index: 4, kind: input, shape index: {}]
  %s5 = inlined_call_operand.vmem [shape: f32[1,128], index: 5, kind: input, shape index: {}]
  %s6 = inlined_call_operand.vmem [shape: f32[1,128], index: 6, kind: input, shape index: {}]
  %s7 = inlined_call_operand.vmem [shape: f32[1,128], index: 7, kind: input, shape index: {}]
  %s8 = inlined_call_operand.vmem [shape: f32[8,128], index: 8, kind: input, shape index: {}]
  %s9 = inlined_call_operand.vmem [shape: f32[4,128], index: 9, kind: output, shape index: {}]
  %s10 = sld [smem:[#allocation0]]
  $region77: #{_lambda_.1} parent=0
    _
  %s12 = ssub.s32 1, %s10
  %s13 = scalar_select 0, %s12, %s10
  loop: start=0, step=1, limit=6
  $region2: #{_lambda_.1} parent=0 // loop_pre_header
    _
  $region3: #{_lambda_.1} parent=0 // loop_header
    %s15 = sphi 0, %s19
    %p16 = scmp.ge.s32.totalorder %s15, 6
    %s25 = sphi 0, %s27
    %s28 = sphi 0, %s25
    %s29 = sphi 0, %s28
    %s45 = sphi 0, %s29
    %s51 = sphi 0, %s53
    %s54 = sphi 0, %s51
    %s55 = sphi 0, %s54
    %s71 = sphi 0, %s55
    %s75 = sphi 0, %s75
    %s77 = sphi 0, %s75
    %s78 = sphi 0, %s77
    %s92 = sphi 0, %s78
    %s96 = sphi 0, %s96
    %s98 = sphi 0, %s96
    %s99 = sphi 0, %s98
    %s113 = sphi 0, %s99
    %s117 = sphi 0, %s117
    %s119 = sphi 0, %s117
    %s120 = sphi 0, %s119
    %s134 = sphi 0, %s120
    %s138 = sphi 0, %s138
    %s140 = sphi 0, %s138
    %s141 = sphi 0, %s140
    %s155 = sphi 0, %s141
    %s159 = sphi 0, %s159
    %s161 = sphi 0, %s159
    %s162 = sphi 0, %s161
    %s176 = sphi 0, %s162
    %s180 = sphi 0, %s180
    %s182 = sphi 0, %s180
    %s183 = sphi 0, %s182
    %s197 = sphi 0, %s183
    %s201 = sphi 0, %s201
    %s203 = sphi 0, %s201
    %s204 = sphi 0, %s203
    %s218 = sphi 0, %s204
    %s222 = sphi 0, %s222
    %s224 = sphi 0, %s222
    %s225 = sphi 0, %s224
    %s239 = sphi 0, %s225
  $region4: #{_lambda_.1} parent=0 // loop_header_branch
    %18 = sbr.rel (%p16) target = $region8
  $region5: #{_lambda_.1} parent=0 // loop_body
    %s20 = ssub.s32 %s15, 1
    %s21 = ssub.s32 %s15, 2
    %s22 = sadd.s32 %s15, 1
    %s23 = ssub.s32 %s15, %s22
    %p24 = scmp.eq.s32.totalorder %s23, 0
    %s26 = sadd.s32 %s25, 1
    %s27 = scalar_select %p24, %s25, %s26
    %p30 = pneg %p24
    %p31 = scmp.eq.s32.totalorder %s15, 3
    %p32 = por %p30, %p31
    %p33 = scmp.ne.s32.totalorder %s25, %s28
    %p34 = scmp.eq.s32.totalorder %s15, 0
    %p35 = por %p33, %p34
    %p36 = scmp.ne.s32.totalorder %s25, %s28
    %p37 = scmp.eq.s32.totalorder %s20, 3
    %p38 = por %p36, %p37
    %p39 = scmp.ne.s32.totalorder %s28, %s29
    %p40 = scmp.eq.s32.totalorder %s20, 0
    %p41 = por %p39, %p40
    %p42 = scmp.ne.s32.totalorder %s28, %s29
    %p43 = scmp.eq.s32.totalorder %s21, 3
    %p44 = por %p42, %p43
    %p46 = scmp.ne.s32.totalorder %s29, %s45
    %p47 = scmp.eq.s32.totalorder %s21, 0
    %p48 = por %p46, %p47
    %s49 = ssub.s32 %s15, %s22
    %p50 = scmp.eq.s32.totalorder %s49, 0
    %s52 = sadd.s32 %s51, 1
    %s53 = scalar_select %p50, %s51, %s52
    %p56 = pneg %p50
    %p57 = scmp.eq.s32.totalorder %s15, 3
    %p58 = por %p56, %p57
    %p59 = scmp.ne.s32.totalorder %s51, %s54
    %p60 = scmp.eq.s32.totalorder %s15, 0
    %p61 = por %p59, %p60
    %p62 = scmp.ne.s32.totalorder %s51, %s54
    %p63 = scmp.eq.s32.totalorder %s20, 3
    %p64 = por %p62, %p63
    %p65 = scmp.ne.s32.totalorder %s54, %s55
    %p66 = scmp.eq.s32.totalorder %s20, 0
    %p67 = por %p65, %p66
    %p68 = scmp.ne.s32.totalorder %s54, %s55
    %p69 = scmp.eq.s32.totalorder %s21, 3
    %p70 = por %p68, %p69
    %p72 = scmp.ne.s32.totalorder %s55, %s71
    %p73 = scmp.eq.s32.totalorder %s21, 0
    %p74 = por %p72, %p73
    %s76 = sadd.s32 %s75, 1
    %p79 = scmp.eq.s32.totalorder %s15, 3
    %p80 = scmp.ne.s32.totalorder %s75, %s77
    %p81 = scmp.eq.s32.totalorder %s15, 0
    %p82 = por %p80, %p81
    %p83 = scmp.ne.s32.totalorder %s75, %s77
    %p84 = scmp.eq.s32.totalorder %s20, 3
    %p85 = por %p83, %p84
    %p86 = scmp.ne.s32.totalorder %s77, %s78
    %p87 = scmp.eq.s32.totalorder %s20, 0
    %p88 = por %p86, %p87
    %p89 = scmp.ne.s32.totalorder %s77, %s78
    %p90 = scmp.eq.s32.totalorder %s21, 3
    %p91 = por %p89, %p90
    %p93 = scmp.ne.s32.totalorder %s78, %s92
    %p94 = scmp.eq.s32.totalorder %s21, 0
    %p95 = por %p93, %p94
    %s97 = sadd.s32 %s96, 1
    %p100 = scmp.eq.s32.totalorder %s15, 3
    %p101 = scmp.ne.s32.totalorder %s96, %s98
    %p102 = scmp.eq.s32.totalorder %s15, 0
    %p103 = por %p101, %p102
    %p104 = scmp.ne.s32.totalorder %s96, %s98
    %p105 = scmp.eq.s32.totalorder %s20, 3
    %p106 = por %p104, %p105
    %p107 = scmp.ne.s32.totalorder %s98, %s99
    %p108 = scmp.eq.s32.totalorder %s20, 0
    %p109 = por %p107, %p108
    %p110 = scmp.ne.s32.totalorder %s98, %s99
    %p111 = scmp.eq.s32.totalorder %s21, 3
    %p112 = por %p110, %p111
    %p114 = scmp.ne.s32.totalorder %s99, %s113
    %p115 = scmp.eq.s32.totalorder %s21, 0
    %p116 = por %p114, %p115
    %s118 = sadd.s32 %s117, 1
    %p121 = scmp.eq.s32.totalorder %s15, 3
    %p122 = scmp.ne.s32.totalorder %s117, %s119
    %p123 = scmp.eq.s32.totalorder %s15, 0
    %p124 = por %p122, %p123
    %p125 = scmp.ne.s32.totalorder %s117, %s119
    %p126 = scmp.eq.s32.totalorder %s20, 3
    %p127 = por %p125, %p126
    %p128 = scmp.ne.s32.totalorder %s119, %s120
    %p129 = scmp.eq.s32.totalorder %s20, 0
    %p130 = por %p128, %p129
    %p131 = scmp.ne.s32.totalorder %s119, %s120
    %p132 = scmp.eq.s32.totalorder %s21, 3
    %p133 = por %p131, %p132
    %p135 = scmp.ne.s32.totalorder %s120, %s134
    %p136 = scmp.eq.s32.totalorder %s21, 0
    %p137 = por %p135, %p136
    %s139 = sadd.s32 %s138, 1
    %p142 = scmp.eq.s32.totalorder %s15, 3
    %p143 = scmp.ne.s32.totalorder %s138, %s140
    %p144 = scmp.eq.s32.totalorder %s15, 0
    %p145 = por %p143, %p144
    %p146 = scmp.ne.s32.totalorder %s138, %s140
    %p147 = scmp.eq.s32.totalorder %s20, 3
    %p148 = por %p146, %p147
    %p149 = scmp.ne.s32.totalorder %s140, %s141
    %p150 = scmp.eq.s32.totalorder %s20, 0
    %p151 = por %p149, %p150
    %p152 = scmp.ne.s32.totalorder %s140, %s141
    %p153 = scmp.eq.s32.totalorder %s21, 3
    %p154 = por %p152, %p153
    %p156 = scmp.ne.s32.totalorder %s141, %s155
    %p157 = scmp.eq.s32.totalorder %s21, 0
    %p158 = por %p156, %p157
    %s160 = sadd.s32 %s159, 1
    %p163 = scmp.eq.s32.totalorder %s15, 3
    %p164 = scmp.ne.s32.totalorder %s159, %s161
    %p165 = scmp.eq.s32.totalorder %s15, 0
    %p166 = por %p164, %p165
    %p167 = scmp.ne.s32.totalorder %s159, %s161
    %p168 = scmp.eq.s32.totalorder %s20, 3
    %p169 = por %p167, %p168
    %p170 = scmp.ne.s32.totalorder %s161, %s162
    %p171 = scmp.eq.s32.totalorder %s20, 0
    %p172 = por %p170, %p171
    %p173 = scmp.ne.s32.totalorder %s161, %s162
    %p174 = scmp.eq.s32.totalorder %s21, 3
    %p175 = por %p173, %p174
    %p177 = scmp.ne.s32.totalorder %s162, %s176
    %p178 = scmp.eq.s32.totalorder %s21, 0
    %p179 = por %p177, %p178
    %s181 = sadd.s32 %s180, 1
    %p184 = scmp.eq.s32.totalorder %s15, 3
    %p185 = scmp.ne.s32.totalorder %s180, %s182
    %p186 = scmp.eq.s32.totalorder %s15, 0
    %p187 = por %p185, %p186
    %p188 = scmp.ne.s32.totalorder %s180, %s182
    %p189 = scmp.eq.s32.totalorder %s20, 3
    %p190 = por %p188, %p189
    %p191 = scmp.ne.s32.totalorder %s182, %s183
    %p192 = scmp.eq.s32.totalorder %s20, 0
    %p193 = por %p191, %p192
    %p194 = scmp.ne.s32.totalorder %s182, %s183
    %p195 = scmp.eq.s32.totalorder %s21, 3
    %p196 = por %p194, %p195
    %p198 = scmp.ne.s32.totalorder %s183, %s197
    %p199 = scmp.eq.s32.totalorder %s21, 0
    %p200 = por %p198, %p199
    %s202 = sadd.s32 %s201, 1
    %p205 = scmp.eq.s32.totalorder %s15, 3
    %p206 = scmp.ne.s32.totalorder %s201, %s203
    %p207 = scmp.eq.s32.totalorder %s15, 0
    %p208 = por %p206, %p207
    %p209 = scmp.ne.s32.totalorder %s201, %s203
    %p210 = scmp.eq.s32.totalorder %s20, 3
    %p211 = por %p209, %p210
    %p212 = scmp.ne.s32.totalorder %s203, %s204
    %p213 = scmp.eq.s32.totalorder %s20, 0
    %p214 = por %p212, %p213
    %p215 = scmp.ne.s32.totalorder %s203, %s204
    %p216 = scmp.eq.s32.totalorder %s21, 3
    %p217 = por %p215, %p216
    %p219 = scmp.ne.s32.totalorder %s204, %s218
    %p220 = scmp.eq.s32.totalorder %s21, 0
    %p221 = por %p219, %p220
    %s223 = sadd.s32 %s222, 1
    %p226 = scmp.eq.s32.totalorder %s15, 3
    %p227 = scmp.ne.s32.totalorder %s222, %s224
    %p228 = scmp.eq.s32.totalorder %s15, 0
    %p229 = por %p227, %p228
    %p230 = scmp.ne.s32.totalorder %s222, %s224
    %p231 = scmp.eq.s32.totalorder %s20, 3
    %p232 = por %p230, %p231
    %p233 = scmp.ne.s32.totalorder %s224, %s225
    %p234 = scmp.eq.s32.totalorder %s20, 0
    %p235 = por %p233, %p234
    %p236 = scmp.ne.s32.totalorder %s224, %s225
    %p237 = scmp.eq.s32.totalorder %s21, 3
    %p238 = por %p236, %p237
    %p240 = scmp.ne.s32.totalorder %s225, %s239
    %p241 = scmp.eq.s32.totalorder %s21, 0
    %p242 = por %p240, %p241
    %p243 = scmp.le.s32.totalorder 1, %s15
    %p244 = scmp.lt.s32.totalorder %s15, 5
    %p245 = pnand %p243, %p244
    %p246 = pneg %p245
    // Predicated region
    $region9: #{_lambda_.1} parent=5 // pred_check
      _
    $region10: #{_lambda_.1} parent=5 // pred_check_branch
      %248 = sbr.rel (%p245) target = $region12
    $region11: #{_lambda_.1} parent=5 // pred_region
      %s249 = ssub.s32 %s15, 1
      // Predicated region
      $region13: #{_lambda_.1} parent=11 // pred_check
        %p250 = pneg %p88
      $region14: #{_lambda_.1} parent=11 // pred_check_branch
        %252 = sbr.rel (%p250) target = $region16
      $region15: #{_lambda_.1} parent=11 // pred_region
        _
      $region16: #{_lambda_.1} parent=11 // pred_fallthru
        _
      // Predicated region
      $region17: #{_lambda_.1} parent=11 // pred_check
        %p253 = pneg %p109
      $region18: #{_lambda_.1} parent=11 // pred_check_branch
        %255 = sbr.rel (%p253) target = $region20
      $region19: #{_lambda_.1} parent=11 // pred_region
        _
      $region20: #{_lambda_.1} parent=11 // pred_fallthru
        _
      // Predicated region
      $region21: #{_lambda_.1} parent=11 // pred_check
        %p256 = pneg %p130
      $region22: #{_lambda_.1} parent=11 // pred_check_branch
        %258 = sbr.rel (%p256) target = $region24
      $region23: #{_lambda_.1} parent=11 // pred_region
        _
      $region24: #{_lambda_.1} parent=11 // pred_fallthru
        _
      // Predicated region
      $region25: #{_lambda_.1} parent=11 // pred_check
        %p259 = pneg %p151
      $region26: #{_lambda_.1} parent=11 // pred_check_branch
        %261 = sbr.rel (%p259) target = $region28
      $region27: #{_lambda_.1} parent=11 // pred_region
        _
      $region28: #{_lambda_.1} parent=11 // pred_fallthru
        _
      // Predicated region
      $region29: #{_lambda_.1} parent=11 // pred_check
        %p262 = pneg %p172
      $region30: #{_lambda_.1} parent=11 // pred_check_branch
        %264 = sbr.rel (%p262) target = $region32
      $region31: #{_lambda_.1} parent=11 // pred_region
        _
      $region32: #{_lambda_.1} parent=11 // pred_fallthru
        _
      // Predicated region
      $region33: #{_lambda_.1} parent=11 // pred_check
        %p265 = pneg %p193
      $region34: #{_lambda_.1} parent=11 // pred_check_branch
        %267 = sbr.rel (%p265) target = $region36
      $region35: #{_lambda_.1} parent=11 // pred_region
        _
      $region36: #{_lambda_.1} parent=11 // pred_fallthru
        _
      // Predicated region
      $region37: #{_lambda_.1} parent=11 // pred_check
        %p268 = pneg %p214
      $region38: #{_lambda_.1} parent=11 // pred_check_branch
        %270 = sbr.rel (%p268) target = $region40
      $region39: #{_lambda_.1} parent=11 // pred_region
        _
      $region40: #{_lambda_.1} parent=11 // pred_fallthru
        _
    $region12: #{_lambda_.1} parent=5 // pred_fallthru
      _
    %p271 = scmp.lt.s32.totalorder %s15, 4
    // Predicated region
    $region41: #{_lambda_.1} parent=5 // pred_check
      %p272 = pneg %p271
    $region42: #{_lambda_.1} parent=5 // pred_check_branch
      %274 = sbr.rel (%p272) target = $region44
    $region43: #{_lambda_.1} parent=5 // pred_region
      // Predicated region
      $region45: #{_lambda_.1} parent=43 // pred_check
        %p275 = pneg %p35
      $region46: #{_lambda_.1} parent=43 // pred_check_branch
        %277 = sbr.rel (%p275) target = $region48
      $region47: #{_lambda_.1} parent=43 // pred_region
        %p278 = scmp.lt.s32.totalorder %s15, 3
        %s279 = scalar_select %p278, %s15, 3
        %s280 = smul.addr %s279, 4
        %s281 = scalar_lea.vmem %s0, %s280
      $region48: #{_lambda_.1} parent=43 // pred_fallthru
        _
      // Predicated region
      $region49: #{_lambda_.1} parent=43 // pred_check
        %p282 = pneg %p61
      $region50: #{_lambda_.1} parent=43 // pred_check_branch
        %284 = sbr.rel (%p282) target = $region52
      $region51: #{_lambda_.1} parent=43 // pred_region
        %p285 = scmp.lt.s32.totalorder %s15, 3
        %s286 = scalar_select %p285, %s15, 3
        %s287 = smul.addr %s286, 4
        %s288 = scalar_lea.vmem %s1, %s287
      $region52: #{_lambda_.1} parent=43 // pred_fallthru
        _
    $region44: #{_lambda_.1} parent=5 // pred_fallthru
      _
    %p289 = scmp.le.s32.totalorder 1, %s15
    %p290 = scmp.lt.s32.totalorder %s15, 5
    %p291 = pnand %p289, %p290
    %p292 = pneg %p291
    // Predicated region
    $region53: #{_lambda_.1} parent=5 // pred_check
      _
    $region54: #{_lambda_.1} parent=5 // pred_check_branch
      %294 = sbr.rel (%p291) target = $region56
    $region55: #{_lambda_.1} parent=5 // pred_region
      %s295 = ssub.s32 %s15, 1
      %p296 = scmp.lt.s32.totalorder %s20, 3
      %s297 = scalar_select %p296, %s20, 3
      %s298 = smul.addr %s297, 4
      %s299 = scalar_lea.vmem %s0, %s298
      %p300 = pneg %p41
      %p301 = pneg %p38
      %p302 = scmp.lt.s32.totalorder %s20, 3
      %s303 = scalar_select %p302, %s20, 3
      %s304 = smul.addr %s303, 4
      %s305 = scalar_lea.vmem %s1, %s304
      %p306 = pneg %p67
      %p307 = pneg %p64
      %p308 = pneg %p88
      %p309 = pneg %p85
      %p310 = pneg %p109
      %p311 = pneg %p106
      %p312 = pneg %p130
      %p313 = pneg %p127
      %p314 = pneg %p151
      %p315 = pneg %p148
      %p316 = pneg %p172
      %p317 = pneg %p169
      %p318 = pneg %p193
      %p319 = pneg %p190
      %p320 = pneg %p214
      %p321 = pneg %p211
      %p322 = pneg %p235
      %p323 = pneg %p232
      %p324 = scmp.lt.s32.totalorder %s20, 3
      %s325 = scalar_select %p324, %s20, 3
      %s326 = smul.addr %s325, 4
      %s327 = scalar_lea.vmem %s0, %s326
      %p328 = scmp.lt.s32.totalorder %s20, 3
      %s329 = scalar_select %p328, %s20, 3
      %s330 = smul.addr %s329, 4
      %s331 = scalar_lea.vmem %s1, %s330
      %p333 = scmp.eq.s32.totalorder %s20, 0
      // Predicated region
      $region57: #{_lambda_.1} parent=55 // pred_check
        %p334 = pneg %p333
      $region58: #{_lambda_.1} parent=55 // pred_check_branch
        %336 = sbr.rel (%p334) target = $region60
      $region59: #{_lambda_.1} parent=55 // pred_region
        %337 = vst [vmem:[#allocation3] sm:$0x1] 0.0
      $region60: #{_lambda_.1} parent=55 // pred_fallthru
        _
      %v338 = vld [vmem:[%s327] sm:$0xf]
      %v339 = vld [vmem:[%s2] sm:$0xf]
      %v340 = vld [vmem:[%s2 + $0x4] sm:$0xf]
      %v341 = vld [vmem:[%s2 + $0x8] sm:$0xf]
      %v342 = vld [vmem:[%s3] sm:$0x1]
      %v344 = vperm.slane %v342, 0
      %v349 = vunpack.c.l.b16 %v339
      %v350 = vunpack.c.l.b16 %v340
      %v351 = vunpack.c.l.b16 %v341
      %v352 = vpack.c.b16 %v350, %v349
      %v353 = vpack.c.b16 %v351, %v351
      %vm355 = vcmask 195584
      %v357 = vsel %vm355, %v338, 0
      %vm359 = vcmask 1043456
      %v361 = vsel %vm359, %v353, 0
      %363 = vmatpush.bf16.msra.mxu0 0
      %364 = vmatpush.bf16.msra.mxu0 0
      %365 = vmatpush.bf16.msra.mxu0 0
      %366 = vmatpush.bf16.msra.mxu0 0
      %367 = vmatpush.bf16.msra.mxu0 0
      %368 = vmatpush.bf16.msra.mxu0 0
      %369 = vmatpush.bf16.msra.mxu0 %v361
      %370 = vmatpush.bf16.msra.mxu0 %v352
      %371 = vmatmul.bf16.gmra.mxu0 %v357
      %v372 = vpop.f32.mrf.mxu0
      %v373 = vadd.f32 %v344, %v372
      %v374 = vpop.f32.mrf.mxu0
      %375 = vdwg.mxu0
      %v376 = vmul.f32 %v373, 0.2
      %v377 = vmax.f32 %v373, %v376
      %v378 = vld [vmem:[%s331] sm:$0xf]
      %v380 = vsel %vm355, %v378, 0
      %382 = vmatpush.bf16.msra.mxu0 0
      %383 = vmatpush.bf16.msra.mxu0 0
      %384 = vmatpush.bf16.msra.mxu0 0
      %385 = vmatpush.bf16.msra.mxu0 0
      %386 = vmatpush.bf16.msra.mxu0 0
      %387 = vmatpush.bf16.msra.mxu0 0
      %388 = vmatpush.bf16.msra.mxu0 %v361
      %389 = vmatpush.bf16.msra.mxu0 %v352
      %390 = vmatmul.bf16.gmra.mxu0 %v380
      %v391 = vpop.f32.mrf.mxu0
      %v392 = vadd.f32 %v344, %v391
      %v393 = vpop.f32.mrf.mxu0
      %394 = vdwg.mxu0
      %v395 = vmul.f32 %v392, 0.2
      %v396 = vmax.f32 %v392, %v395
      %v397 = vlaneseq
      %v398 = vshrl.u32 %v397, 7
      %vm399 = vcmp.lt.s32.totalorder %v398, 0
      %v400 = vsub.s32 0, %v398
      %v401 = vsel %vm399, %v400, %v398
      %v402 = vshrl.u32 %v401, 3
      %v403 = vand.u32 %v401, 7
      %v404 = vsub.s32 0, %v403
      %v405 = vsel %vm399, %v404, %v403
      %vm406 = vcmp.ne.s32.totalorder %v405, 0
      %vm407 = vcmp.lt.s32.totalorder %v405, 0
      %vm408 = vmand %vm407, %vm406
      %v409 = vadd.s32 %v405, 8
      %v410 = vsel %vm408, %v409, %v405
      %vm411 = vcmp.eq.s32.totalorder %v410, 0
      %v412 = vrot.slane %v396, 7
      %v413 = vsel %vm411, 1, 0
      %vm414 = vcmp.eq.s32.totalorder %v413, 1
      %v415 = vsel %vm414, 0.0, %v412
      %v416 = vpack.c.bf16 %v415, %v415
      %v417 = vpack.c.bf16 %v377, %v377
      %v418 = vpack.c.bf16 %v396, %v396
      %v419 = vld [vmem:[%s4] sm:$0xf]
      %v420 = vld [vmem:[%s4 + $0x4] sm:$0xf]
      %v421 = vld [vmem:[%s4 + $0x8] sm:$0xf]
      %v422 = vld [vmem:[%s4 + $0xc] sm:$0xf]
      %v423 = vld [vmem:[%s4 + $0x10] sm:$0xf]
      %v424 = vld [vmem:[%s4 + $0x14] sm:$0xf]
      %v425 = vld [vmem:[%s4 + $0x18] sm:$0xf]
      %v426 = vld [vmem:[%s4 + $0x1c] sm:$0xf]
      %v427 = vld [vmem:[%s4 + $0x20] sm:$0xf]
      %v428 = vld [vmem:[%s4 + $0x24] sm:$0xf]
      %v429 = vld [vmem:[%s4 + $0x28] sm:$0xf]
      %v430 = vld [vmem:[%s4 + $0x2c] sm:$0xf]
      %v431 = vld [vmem:[%s4 + $0x30] sm:$0xf]
      %v432 = vld [vmem:[%s4 + $0x34] sm:$0xf]
      %v433 = vld [vmem:[%s4 + $0x38] sm:$0xf]
      %v434 = vld [vmem:[%s4 + $0x3c] sm:$0xf]
      %v443 = vunpack.c.l.b16 %v427
      %v444 = vunpack.c.l.b16 %v428
      %v445 = vunpack.c.l.b16 %v429
      %v446 = vunpack.c.l.b16 %v430
      %v447 = vunpack.c.l.b16 %v431
      %v448 = vunpack.c.l.b16 %v432
      %v449 = vunpack.c.l.b16 %v433
      %v450 = vunpack.c.l.b16 %v434
      %v451 = vpack.c.b16 %v444, %v443
      %v452 = vpack.c.b16 %v446, %v445
      %v453 = vpack.c.b16 %v448, %v447
      %v454 = vpack.c.b16 %v450, %v449
      %vm459 = vcmask 523264
      %v461 = vsel %vm459, %v417, 0
      %463 = vmatpush.bf16.msra.mxu0 0
      %464 = vmatpush.bf16.msra.mxu0 0
      %465 = vmatpush.bf16.msra.mxu0 0
      %466 = vmatpush.bf16.msra.mxu0 0
      %467 = vmatpush.bf16.msra.mxu0 %v454
      %468 = vmatpush.bf16.msra.mxu0 %v453
      %469 = vmatpush.bf16.msra.mxu0 %v452
      %470 = vmatpush.bf16.msra.mxu0 %v451
      %471 = vmatmul.bf16.gmra.mxu0 %v461
      %v472 = vpop.f32.mrf.mxu0
      %v473 = vadd.f32 0.0, %v472
      %v474 = vpop.f32.mrf.mxu0
      %475 = vdwg.mxu0
      %v484 = vunpack.c.l.b16 %v419
      %v485 = vunpack.c.l.b16 %v420
      %v486 = vunpack.c.l.b16 %v421
      %v487 = vunpack.c.l.b16 %v422
      %v488 = vunpack.c.l.b16 %v423
      %v489 = vunpack.c.l.b16 %v424
      %v490 = vunpack.c.l.b16 %v425
      %v491 = vunpack.c.l.b16 %v426
      %v492 = vpack.c.b16 %v485, %v484
      %v493 = vpack.c.b16 %v487, %v486
      %v494 = vpack.c.b16 %v489, %v488
      %v495 = vpack.c.b16 %v491, %v490
      %v501 = vsel %vm459, %v416, 0
      %503 = vmatpush.bf16.msra.mxu0 0
      %504 = vmatpush.bf16.msra.mxu0 0
      %505 = vmatpush.bf16.msra.mxu0 0
      %506 = vmatpush.bf16.msra.mxu0 0
      %507 = vmatpush.bf16.msra.mxu0 %v495
      %508 = vmatpush.bf16.msra.mxu0 %v494
      %509 = vmatpush.bf16.msra.mxu0 %v493
      %510 = vmatpush.bf16.msra.mxu0 %v492
      %511 = vmatmul.bf16.gmra.mxu0 %v501
      %v512 = vpop.f32.mrf.mxu0
      %v513 = vadd.f32 %v473, %v512
      %v514 = vpop.f32.mrf.mxu0
      %515 = vdwg.mxu0
      %v516 = vld [vmem:[%s4 + $0x40] sm:$0xf]
      %v517 = vld [vmem:[%s4 + $0x44] sm:$0xf]
      %v518 = vld [vmem:[%s4 + $0x48] sm:$0xf]
      %v519 = vld [vmem:[%s4 + $0x4c] sm:$0xf]
      %v520 = vld [vmem:[%s4 + $0x50] sm:$0xf]
      %v521 = vld [vmem:[%s4 + $0x54] sm:$0xf]
      %v522 = vld [vmem:[%s4 + $0x58] sm:$0xf]
      %v523 = vld [vmem:[%s4 + $0x5c] sm:$0xf]
      %v532 = vunpack.c.l.b16 %v516
      %v533 = vunpack.c.l.b16 %v517
      %v534 = vunpack.c.l.b16 %v518
      %v535 = vunpack.c.l.b16 %v519
      %v536 = vunpack.c.l.b16 %v520
      %v537 = vunpack.c.l.b16 %v521
      %v538 = vunpack.c.l.b16 %v522
      %v539 = vunpack.c.l.b16 %v523
      %v540 = vpack.c.b16 %v533, %v532
      %v541 = vpack.c.b16 %v535, %v534
      %v542 = vpack.c.b16 %v537, %v536
      %v543 = vpack.c.b16 %v539, %v538
      %v549 = vsel %vm459, %v418, 0
      %551 = vmatpush.bf16.msra.mxu0 0
      %552 = vmatpush.bf16.msra.mxu0 0
      %553 = vmatpush.bf16.msra.mxu0 0
      %554 = vmatpush.bf16.msra.mxu0 0
      %555 = vmatpush.bf16.msra.mxu0 %v543
      %556 = vmatpush.bf16.msra.mxu0 %v542
      %557 = vmatpush.bf16.msra.mxu0 %v541
      %558 = vmatpush.bf16.msra.mxu0 %v540
      %559 = vmatmul.bf16.gmra.mxu0 %v549
      %v560 = vpop.f32.mrf.mxu0
      %v561 = vadd.f32 0.0, %v560
      %v562 = vpop.f32.mrf.mxu0
      %563 = vdwg.mxu0
      %v564 = vadd.f32 %v513, %v561
      %v565 = vld [vmem:[%s5] sm:$0x1]
      %v567 = vperm.slane %v565, 0
      %v569 = vadd.f32 %v564, %v567
      %s570 = smul.u32 %s20, 8
      %s571 = scalar_lea.vmem [#allocation2], %s570
      %572 = vst [vmem:[%s571] sm:$0xff] %v569
      %v573 = vld [vmem:[#allocation3] sm:$0x1]
      %v574 = vrot.slane %v569, 4
      %v575 = vadd.f32 %v569, %v574
      %v576 = vrot.slane %v575, 2
      %v577 = vadd.f32 %v575, %v576
      %v578 = vrot.slane %v577, 1
      %v579 = vadd.f32 %v577, %v578
      %v580 = vadd.f32 %v573, %v579
      %581 = vst [vmem:[#allocation3] sm:$0x1] %v580
      %p582 = scmp.eq.s32.totalorder %s20, 3
      // Predicated region
      $region61: #{_lambda_.1} parent=55 // pred_check
        %p583 = pneg %p582
      $region62: #{_lambda_.1} parent=55 // pred_check_branch
        %585 = sbr.rel (%p583) target = $region64
      $region63: #{_lambda_.1} parent=55 // pred_region
        %v586 = vld [vmem:[#allocation3] sm:$0x1]
        %v587 = vmul.f32 %v586, 0.03125
        %v588 = vld [vmem:[#allocation2] sm:$0xff]
        %v589 = vld [vmem:[#allocation2 + $0x8] sm:$0xff]
        %v590 = vld [vmem:[#allocation2 + $0x10] sm:$0xff]
        %v591 = vld [vmem:[#allocation2 + $0x18] sm:$0xff]
        %v593 = vperm.slane %v587, 0
        %v595 = vsub.f32 %v588, %v593
        %v596 = vsub.f32 %v589, %v593
        %v597 = vsub.f32 %v590, %v593
        %v598 = vsub.f32 %v591, %v593
        %v599 = vmul.f32 %v595, %v595
        %v600 = vmul.f32 %v596, %v596
        %v601 = vmul.f32 %v597, %v597
        %v602 = vmul.f32 %v598, %v598
        %v603 = vadd.f32 %v599, %v600
        %v604 = vadd.f32 %v603, %v601
        %v605 = vadd.f32 %v604, %v602
        %v606 = vrot.slane %v605, 4
        %v607 = vadd.f32 %v605, %v606
        %v608 = vrot.slane %v607, 2
        %v609 = vadd.f32 %v607, %v608
        %v610 = vrot.slane %v609, 1
        %v611 = vadd.f32 %v609, %v610
        %v612 = vmul.f32 %v611, 0.03125
        %v613 = vld [vmem:[%s6] sm:$0x1]
        %v614 = vadd.f32 %v612, 1e-05
        %v615 = vrsqrt.pop %v614
        %v616 = vmul.f32 %v615, %v614
        %v617 = vmul.f32 %v616, %v615
        %v618 = vmul.f32 0.5, %v617
        %v619 = vsub.f32 1.5, %v618
        %v620 = vmul.f32 %v615, %v619
        %vm621 = vweird.f32 %v614
        %vm622 = vweird.f32 %v615
        %vm623 = vmor %vm621, %vm622
        %v624 = vsel %vm623, %v615, %v620
        %v625 = vmul.f32 %v613, %v624
        %v626 = vld [vmem:[%s7] sm:$0x1]
        %v627 = vmul.f32 %v587, %v625
        %v628 = vsub.f32 %v626, %v627
        %v630 = vperm.slane %v625, 0
        %v632 = vmul.f32 %v588, %v630
        %v633 = vmul.f32 %v589, %v630
        %v634 = vmul.f32 %v590, %v630
        %v635 = vmul.f32 %v591, %v630
        %v637 = vperm.slane %v628, 0
        %v639 = vadd.f32 %v632, %v637
        %v640 = vadd.f32 %v633, %v637
        %v641 = vadd.f32 %v634, %v637
        %v642 = vadd.f32 %v635, %v637
        %v643 = vmul.f32 %v639, 0.2
        %v644 = vmul.f32 %v640, 0.2
        %v645 = vmul.f32 %v641, 0.2
        %v646 = vmul.f32 %v642, 0.2
        %v647 = vmax.f32 %v639, %v643
        %v648 = vmax.f32 %v640, %v644
        %v649 = vmax.f32 %v641, %v645
        %v650 = vmax.f32 %v642, %v646
        %v651 = vld [vmem:[%s8] sm:$0xff]
        %v652 = vmul.f32 %v647, %v651
        %v653 = vmul.f32 %v648, %v651
        %v654 = vmul.f32 %v649, %v651
        %v655 = vmul.f32 %v650, %v651
        %v656 = vrot.slane %v652, 4
        %v657 = vadd.f32 %v652, %v656
        %v658 = vrot.slane %v657, 2
        %v659 = vadd.f32 %v657, %v658
        %v660 = vrot.slane %v659, 1
        %v661 = vadd.f32 %v659, %v660
        %v662 = vrot.slane %v653, 4
        %v663 = vadd.f32 %v653, %v662
        %v664 = vrot.slane %v663, 2
        %v665 = vadd.f32 %v663, %v664
        %v666 = vrot.slane %v665, 1
        %v667 = vadd.f32 %v665, %v666
        %v668 = vrot.slane %v654, 4
        %v669 = vadd.f32 %v654, %v668
        %v670 = vrot.slane %v669, 2
        %v671 = vadd.f32 %v669, %v670
        %v672 = vrot.slane %v671, 1
        %v673 = vadd.f32 %v671, %v672
        %v674 = vrot.slane %v655, 4
        %v675 = vadd.f32 %v655, %v674
        %v676 = vrot.slane %v675, 2
        %v677 = vadd.f32 %v675, %v676
        %v678 = vrot.slane %v677, 1
        %v679 = vadd.f32 %v677, %v678
        %vm684 = vcmask 1041409
        %v685 = vsel %vm684, %v667, %v661
        %vm686 = vcmask 1042434
        %v687 = vsel %vm686, %v673, %v685
        %vm688 = vcmask 1043459
        %v689 = vsel %vm688, %v679, %v687
        %691 = vst [vmem:[%s9] sm:$0xf] %v689
      $region64: #{_lambda_.1} parent=55 // pred_fallthru
        _
      // Predicated region
      $region65: #{_lambda_.1} parent=55 // pred_check
        %p692 = pneg %p232
      $region66: #{_lambda_.1} parent=55 // pred_check_branch
        %694 = sbr.rel (%p692) target = $region68
      $region67: #{_lambda_.1} parent=55 // pred_region
        _
      $region68: #{_lambda_.1} parent=55 // pred_fallthru
        _
      // Predicated region
      $region69: #{_lambda_.1} parent=55 // pred_check
        %p695 = pneg %p232
      $region70: #{_lambda_.1} parent=55 // pred_check_branch
        %697 = sbr.rel (%p695) target = $region72
      $region71: #{_lambda_.1} parent=55 // pred_region
        _
      $region72: #{_lambda_.1} parent=55 // pred_fallthru
        _
    $region56: #{_lambda_.1} parent=5 // pred_fallthru
      _
    %p698 = scmp.le.s32.totalorder 2, %s15
    // Predicated region
    $region73: #{_lambda_.1} parent=5 // pred_check
      %p699 = pneg %p698
    $region74: #{_lambda_.1} parent=5 // pred_check_branch
      %701 = sbr.rel (%p699) target = $region76
    $region75: #{_lambda_.1} parent=5 // pred_region
      %s702 = ssub.s32 %s15, 2
    $region76: #{_lambda_.1} parent=5 // pred_fallthru
      _
  $region6: #{_lambda_.1} parent=0 // loop_footer
    %s19 = sadd.s32 1, %s15
  $region7: #{_lambda_.1} parent=0 // loop_footer_branch
    %14 = sbr.rel target = $region3
  $region8: #{_lambda_.1} parent=0 // loop_exit
    _

</llo_original>
